<compile_context>
chip_gen: v7x
topology: tpu7x:2x2x1
jax: 0.10.0
libtpu: 0.0.40
codegen_flags: <defaults>
</compile_context>

<pallas_src>
import jax
import jax.numpy as jnp
from jax.experimental import pallas as pl
from jax.experimental.pallas import tpu as pltpu


def _choose_channel_block(C, H, W, Ho, Wo, in_itemsize):
    """Largest channel-block Cb (divisor of C) whose double-buffered input +
    f32 output blocks fit comfortably under the v7x scoped-VMEM default,
    preferring an even grid (>= 2 steps) so both v7x TensorCores get work."""
    budget = 16 * 1024 * 1024  # conservative slice of the 32 MiB scoped default
    per_channel = 2 * (H * W * in_itemsize + Ho * Wo * 4)  # 2x = double buffering
    max_cb = max(1, budget // per_channel)
    divisors = [d for d in range(1, C + 1) if C % d == 0 and d <= max_cb]
    even = [d for d in divisors if (C // d) >= 2 and (C // d) % 2 == 0]
    if even:
        return max(even)
    return max(divisors)


def _make_pad_kernel(Cb, H, W, Ho, Wo):
    pad_r = Wo - W - 1  # right zero columns (left pad is hard-coded 1, per the module)
    pad_b = Ho - H - 1  # bottom zero rows   (top  pad is hard-coded 1, per the module)

    def pad_kernel(x_ref, o_ref):
        dt = o_ref.dtype
        x = x_ref[...].astype(dt)                                     # (Cb, H, W)
        # Build the full padded tile in registers, then store it exactly once.
        rows = jnp.concatenate(
            [jnp.zeros((Cb, H, 1), dt), x, jnp.zeros((Cb, H, pad_r), dt)],
            axis=2)                                                   # (Cb, H, Wo)
        full = jnp.concatenate(
            [jnp.zeros((Cb, 1, Wo), dt), rows, jnp.zeros((Cb, pad_b, Wo), dt)],
            axis=1)                                                   # (Cb, Ho, Wo)
        o_ref[...] = full

    return pad_kernel


def zero_pad_2d(x, padding):
    """x: (C, H, W). padding > 0 -> (C, H+2p, W+2p) float32 with x at offset
    (1, 1) (reference quirk); padding <= 0 -> x unchanged (original dtype)."""
    if padding <= 0:
        return x

    C, H, W = x.shape
    Ho, Wo = H + 2 * padding, W + 2 * padding
    Cb = _choose_channel_block(C, H, W, Ho, Wo, x.dtype.itemsize)

    kernel = _make_pad_kernel(Cb, H, W, Ho, Wo)

    return pl.pallas_call(
        kernel,
        out_shape=jax.ShapeDtypeStruct((C, Ho, Wo), jnp.float32),
        grid_spec=pltpu.PrefetchScalarGridSpec(
            num_scalar_prefetch=0,
            grid=(C // Cb,),
            in_specs=[pl.BlockSpec((Cb, H, W), lambda c: (c, 0, 0))],
            out_specs=pl.BlockSpec((Cb, Ho, Wo), lambda c: (c, 0, 0)),
        ),
        compiler_params=pltpu.CompilerParams(
            dimension_semantics=("parallel",),
        ),
    )(x)


def _reference(x, padding):
    """Pure-JAX reproduction of the module's exact semantics."""
    if padding <= 0:
        return x
    C, H, W = x.shape
    ref = jnp.zeros((C, H + 2 * padding, W + 2 * padding), jnp.float32)
    return ref.at[:, 1:1 + H, 1:1 + W].set(x.astype(jnp.float32))


if __name__ == "__main__":
    key = jax.random.PRNGKey(0)
    C, H, W = 4, 16, 16
    x = jax.random.normal(key, (C, H, W), dtype=jnp.float32)

    for padding in (1, 2):
        out = jax.block_until_ready(zero_pad_2d(x, padding))
        ref = _reference(x, padding)
        assert out.shape == (C, H + 2 * padding, W + 2 * padding), out.shape
        assert out.dtype == jnp.float32, out.dtype
        assert jnp.allclose(out, ref), f"mismatch vs reference (padding={padding})"

    # padding == 0 path: identity.
    out0 = jax.block_until_ready(zero_pad_2d(x, 0))
    assert out0.shape == x.shape and jnp.allclose(out0, x)

    print("KERNEL_OK")
</pallas_src>

<mosaic_0001>
module attributes {stable_mosaic.version = 11 : i64} {
  func.func @pad_kernel(%arg0: i32, %arg1: memref<2x16x16xf32, #tpu.memory_space<vmem>>, %arg2: memref<2x18x18xf32, #tpu.memory_space<vmem>>) attributes {dimension_semantics = [#tpu.dimension_semantics<parallel>], iteration_bounds = array<i64: 2>, scalar_prefetch = 0 : i64, scratch_operands = 0 : i64, tpu.core_type = #tpu.core_type<tc>, window_params = [{transform_indices = @transform_0, window_bounds = array<i64: 2, 16, 16>}, {transform_indices = @transform_1, window_bounds = array<i64: 2, 18, 18>}]} {
    %c0 = arith.constant 0 : index
    %c0_0 = arith.constant 0 : index
    %c0_1 = arith.constant 0 : index
    %0 = vector.load %arg1[%c0, %c0_0, %c0_1] : memref<2x16x16xf32, #tpu.memory_space<vmem>>, vector<2x16x16xf32>
    %cst = arith.constant 0.000000e+00 : f32
    %1 = vector.broadcast %cst : f32 to vector<2x16x1xf32>
    %cst_2 = arith.constant 0.000000e+00 : f32
    %2 = vector.broadcast %cst_2 : f32 to vector<2x16x1xf32>
    %3 = tpu.concatenate %1, %0, %2 in 2 : vector<2x16x1xf32>, vector<2x16x16xf32>, vector<2x16x1xf32> -> vector<2x16x18xf32>
    %cst_3 = arith.constant 0.000000e+00 : f32
    %4 = vector.broadcast %cst_3 : f32 to vector<2x1x18xf32>
    %cst_4 = arith.constant 0.000000e+00 : f32
    %5 = vector.broadcast %cst_4 : f32 to vector<2x1x18xf32>
    %6 = tpu.concatenate %4, %3, %5 in 1 : vector<2x1x18xf32>, vector<2x16x18xf32>, vector<2x1x18xf32> -> vector<2x18x18xf32>
    %c0_5 = arith.constant 0 : index
    %c0_6 = arith.constant 0 : index
    %c0_7 = arith.constant 0 : index
    %7 = vector.load %arg2[%c0_5, %c0_6, %c0_7] : memref<2x18x18xf32, #tpu.memory_space<vmem>>, vector<2x18x18xf32>
    tpu.vector_store %arg2[%c0_5, %c0_6, %c0_7], %6 {strides = array<i32>} : memref<2x18x18xf32, #tpu.memory_space<vmem>>, vector<2x18x18xf32>,
    return
  }
  func.func @transform_0(%arg0: i32) -> (i32, i32, i32) {
    %c0_i32 = arith.constant 0 : i32
    %c0_i32_0 = arith.constant 0 : i32
    %c0_i32_1 = arith.constant 0 : i32
    return %arg0, %c0_i32, %c0_i32_0 : i32, i32, i32
  }
  func.func @transform_1(%arg0: i32) -> (i32, i32, i32) {
    %c0_i32 = arith.constant 0 : i32
    %c0_i32_0 = arith.constant 0 : i32
    %c0_i32_1 = arith.constant 0 : i32
    return %arg0, %c0_i32, %c0_i32_0 : i32, i32, i32
  }
}

</mosaic_0001>

<llo_original>
// kernel: tpu_custom_call.1
$region0: #{tpu_custom_call.1}
  #allocation0 [shape = 'u32[]', space=smem, size = 0x4, offset = 0x4, fixed_abs, tag = 'smem constant byte address 0x4 - core index']
  #allocation1 [shape = 'u32[144,128]{1,0:T(1,128)}', space=vmem, size = 0x12000, scoped, tag = 'internal scratch']
  %s0 = inlined_call_operand.hbm [shape: f32[4,16,16], index: 0, kind: input, shape index: {}]
  %s1 = inlined_call_operand.vmem [shape: f32[4,18,18], index: 1, kind: output, shape index: {}]
  %s2 = sld [smem:[#allocation0]]
  $region41: #{tpu_custom_call.1} parent=0
    _
  %s4 = ssub.s32 1, %s2
  %s5 = scalar_select 0, %s4, %s2
  $region1: #{tpu_custom_call.1} parent=0
    #allocation2 [shape = 'u8[32768]{0}', space=vmem, size = 0x8000, scoped, tag = 'input window, operand 0']
    #allocation3 [shape = 's32[2]{0}', space=sflag, size = 0x8, scoped, tag = 'scoped memory for tpu_custom_call.1']
    %6 = vsyncpa [#allocation3], 0
    %s7 = scalar_lea.sflag [#allocation3], 1
    %8 = vsyncpa %s7, 0
    loop: start=0, step=1, limit=4
    $region2: #{tpu_custom_call.1} parent=1 // loop_pre_header
      _
    $region3: #{tpu_custom_call.1} parent=1 // loop_header
      %s10 = sphi 0, %s14
      %p11 = scmp.ge.s32.totalorder %s10, 4
      %s20 = sphi 0, %s22
      %s23 = sphi 0, %s20
      %s24 = sphi 0, %s23
      %s40 = sphi 0, %s24
      %s46 = sphi 0, %s48
      %s49 = sphi 0, %s46
      %s50 = sphi 0, %s49
      %s66 = sphi 0, %s50
    $region4: #{tpu_custom_call.1} parent=1 // loop_header_branch
      %13 = sbr.rel (%p11) target = $region8
    $region5: #{tpu_custom_call.1} parent=1 // loop_body
      %s15 = ssub.s32 %s10, 1
      %s16 = ssub.s32 %s10, 2
      %s17 = sadd.s32 %s10, 1
      %s18 = ssub.s32 %s10, %s17
      %p19 = scmp.eq.s32.totalorder %s18, 0
      %s21 = sadd.s32 %s20, 1
      %s22 = scalar_select %p19, %s20, %s21
      %p25 = pneg %p19
      %p26 = scmp.eq.s32.totalorder %s10, 1
      %p27 = por %p25, %p26
      %p28 = scmp.ne.s32.totalorder %s20, %s23
      %p29 = scmp.eq.s32.totalorder %s10, 0
      %p30 = por %p28, %p29
      %p31 = scmp.ne.s32.totalorder %s20, %s23
      %p32 = scmp.eq.s32.totalorder %s15, 1
      %p33 = por %p31, %p32
      %p34 = scmp.ne.s32.totalorder %s23, %s24
      %p35 = scmp.eq.s32.totalorder %s15, 0
      %p36 = por %p34, %p35
      %p37 = scmp.ne.s32.totalorder %s23, %s24
      %p38 = scmp.eq.s32.totalorder %s16, 1
      %p39 = por %p37, %p38
      %p41 = scmp.ne.s32.totalorder %s24, %s40
      %p42 = scmp.eq.s32.totalorder %s16, 0
      %p43 = por %p41, %p42
      %s44 = ssub.s32 %s10, %s17
      %p45 = scmp.eq.s32.totalorder %s44, 0
      %s47 = sadd.s32 %s46, 1
      %s48 = scalar_select %p45, %s46, %s47
      %p51 = pneg %p45
      %p52 = scmp.eq.s32.totalorder %s10, 1
      %p53 = por %p51, %p52
      %p54 = scmp.ne.s32.totalorder %s46, %s49
      %p55 = scmp.eq.s32.totalorder %s10, 0
      %p56 = por %p54, %p55
      %p57 = scmp.ne.s32.totalorder %s46, %s49
      %p58 = scmp.eq.s32.totalorder %s15, 1
      %p59 = por %p57, %p58
      %p60 = scmp.ne.s32.totalorder %s49, %s50
      %p61 = scmp.eq.s32.totalorder %s15, 0
      %p62 = por %p60, %p61
      %p63 = scmp.ne.s32.totalorder %s49, %s50
      %p64 = scmp.eq.s32.totalorder %s16, 1
      %p65 = por %p63, %p64
      %p67 = scmp.ne.s32.totalorder %s50, %s66
      %p68 = scmp.eq.s32.totalorder %s16, 0
      %p69 = por %p67, %p68
      %p70 = scmp.le.s32.totalorder 1, %s10
      %p71 = scmp.lt.s32.totalorder %s10, 3
      %p72 = pnand %p70, %p71
      %p73 = pneg %p72
      // Predicated region
      $region9: #{tpu_custom_call.1} parent=5 // pred_check
        _
      $region10: #{tpu_custom_call.1} parent=5 // pred_check_branch
        %75 = sbr.rel (%p72) target = $region12
      $region11: #{tpu_custom_call.1} parent=5 // pred_region
        %s76 = ssub.s32 %s10, 1
      $region12: #{tpu_custom_call.1} parent=5 // pred_fallthru
        _
      %p77 = scmp.lt.s32.totalorder %s10, 2
      // Predicated region
      $region13: #{tpu_custom_call.1} parent=5 // pred_check
        %p78 = pneg %p77
      $region14: #{tpu_custom_call.1} parent=5 // pred_check_branch
        %80 = sbr.rel (%p78) target = $region16
      $region15: #{tpu_custom_call.1} parent=5 // pred_region
        // Predicated region
        $region17: #{tpu_custom_call.1} parent=15 // pred_check
          %p81 = pneg %p30
        $region18: #{tpu_custom_call.1} parent=15 // pred_check_branch
          %83 = sbr.rel (%p81) target = $region20
        $region19: #{tpu_custom_call.1} parent=15 // pred_region
          %s84 = sand.u32 %s20, 1
          %s85 = scalar_lea.sflag [#allocation3], %s84
          %s86 = sand.u32 %s20, 1
          %s87 = smul.addr %s86, 32
          %s88 = scalar_lea.vmem [#allocation2], %s87
          %s89 = smul.u32 2, %s10
          %s91 = ssub.s32 512, 512
          %92 = vsyncadd %s85, %s91
          %s93 = smul.addr %s89, 2
          %s94 = smul.addr %s93, 128
          %s95 = scalar_lea.hbm %s0, %s94
          %s96 = sshll.u32 %s88, 4
          %s97 = int_to_ptr.vmem [resolvable:$true] %s96
          %102 = dma.hbm_to_vmem [thread:$0]  %s95, 512, %s97, %s85, 128, 128, 8
        $region20: #{tpu_custom_call.1} parent=15 // pred_fallthru
          _
      $region16: #{tpu_custom_call.1} parent=5 // pred_fallthru
        _
      %p103 = scmp.le.s32.totalorder 1, %s10
      %p104 = scmp.lt.s32.totalorder %s10, 3
      %p105 = pnand %p103, %p104
      %p106 = pneg %p105
      // Predicated region
      $region21: #{tpu_custom_call.1} parent=5 // pred_check
        _
      $region22: #{tpu_custom_call.1} parent=5 // pred_check_branch
        %108 = sbr.rel (%p105) target = $region24
      $region23: #{tpu_custom_call.1} parent=5 // pred_region
        %s109 = ssub.s32 %s10, 1
        %s110 = sand.u32 %s23, 1
        %s111 = scalar_lea.sflag [#allocation3], %s110
        %s112 = sand.u32 %s23, 1
        %s113 = smul.addr %s112, 32
        %s114 = scalar_lea.vmem [#allocation2], %s113
        // Predicated region
        $region25: #{tpu_custom_call.1} parent=23 // pred_check
          %p115 = pneg %p36
        $region26: #{tpu_custom_call.1} parent=23 // pred_check_branch
          %117 = sbr.rel (%p115) target = $region28
        $region27: #{tpu_custom_call.1} parent=23 // pred_region
          %118 = dma.done %s111, 512
        $region28: #{tpu_custom_call.1} parent=23 // pred_fallthru
          _
        %s119 = sand.u32 %s23, 1
        %s120 = scalar_lea.sflag [#allocation3], %s119
        %s121 = sand.u32 %s23, 1
        %s122 = smul.addr %s121, 32
        %s123 = scalar_lea.vmem [#allocation2], %s122
        %p124 = pneg %p36
        %p125 = pneg %p33
        %p126 = pneg %p62
        %p127 = pneg %p59
        %s128 = smul.u32 2, %s15
        %p129 = scmp.lt.s32.totalorder %s128, 3
        %s130 = scalar_select %p129, %s128, 3
        %s131 = smul.addr %s130, 3
        %s132 = smul.addr %s131, 8
        %s133 = scalar_lea.vmem %s1, %s132
        %s134 = smul.u32 2, %s15
        %s135 = smul.u32 2, %s15
        %p136 = scmp.lt.s32.totalorder %s135, 3
        %s137 = scalar_select %p136, %s135, 3
        %s138 = smul.addr %s137, 3
        %s139 = smul.addr %s138, 8
        %s140 = scalar_lea.vmem %s1, %s139
        %s141 = smul.u32 2, %s15
        %v142 = vld [vmem:[%s114] sm:$0xff]
        %v143 = vld [vmem:[%s114 + $0x8] sm:$0xff]
        %v144 = vld [vmem:[%s114 + $0x10] sm:$0xff]
        %v145 = vld [vmem:[%s114 + $0x18] sm:$0xff]
        %150 = vrot.lane.b32.xlu0 %v142, 1
        %v151 = vpop.permute.xlu0 %150
        %152 = vrot.lane.b32.xlu0 %v143, 1
        %v153 = vpop.permute.xlu0 %152
        %154 = vrot.lane.b32.xlu0 %v144, 1
        %v155 = vpop.permute.xlu0 %154
        %156 = vrot.lane.b32.xlu0 %v145, 1
        %v157 = vpop.permute.xlu0 %156
        %vm162 = vcmask 7168
        %v163 = vsel %vm162, 0.0, %v151
        %v164 = vsel %vm162, 0.0, %v153
        %v165 = vsel %vm162, 0.0, %v155
        %v166 = vsel %vm162, 0.0, %v157
        %vm167 = vcmask 138240
        %v168 = vsel %vm167, %v163, 0.0
        %v169 = vsel %vm167, %v164, 0.0
        %v170 = vsel %vm167, %v165, 0.0
        %v171 = vsel %vm167, %v166, 0.0
        %vm176 = vcmask 1040384
        %v177 = vrot.slane %v168, 7
        %v178 = vrot.slane %v169, 7
        %v179 = vsel %vm176, %v177, %v178
        %v180 = vrot.slane %v170, 7
        %v181 = vrot.slane %v171, 7
        %v182 = vsel %vm176, %v180, %v181
        %v189 = vsel %vm176, 0.0, %v177
        %v190 = vsel %vm176, 0.0, %v180
        %v191 = vsel %vm176, %v178, 0.0
        %v192 = vsel %vm176, %v181, 0.0
        %vm193 = vcmask 146432
        %194 = vst.msk [vmem:[%s140] sm:$0xff] %vm193, %v189
        %195 = vst.msk [vmem:[%s140 + $0x8] sm:$0xff] %vm193, %v179
        %vm196 = vcmask 140288
        %197 = vst.msk [vmem:[%s140 + $0x10] sm:$0x3] %vm196, %v191
        %198 = vst.msk [vmem:[%s140 + $0x18] sm:$0xff] %vm193, %v190
        %199 = vst.msk [vmem:[%s140 + $0x20] sm:$0xff] %vm193, %v182
        %200 = vst.msk [vmem:[%s140 + $0x28] sm:$0x3] %vm196, %v192
        %s201 = smul.u32 2, %s15
        %p202 = scmp.lt.s32.totalorder %s201, 3
        %s203 = scalar_select %p202, %s201, 3
        %s204 = smul.addr %s203, 3
        %s205 = smul.addr %s204, 8
        %s206 = scalar_lea.vmem %s1, %s205
        // Predicated region
        $region29: #{tpu_custom_call.1} parent=23 // pred_check
          %p207 = pneg %p59
        $region30: #{tpu_custom_call.1} parent=23 // pred_check_branch
          %209 = sbr.rel (%p207) target = $region32
        $region31: #{tpu_custom_call.1} parent=23 // pred_region
          %s210 = smul.u32 2, %s15
        $region32: #{tpu_custom_call.1} parent=23 // pred_fallthru
          _
      $region24: #{tpu_custom_call.1} parent=5 // pred_fallthru
        _
      %p211 = scmp.le.s32.totalorder 2, %s10
      // Predicated region
      $region33: #{tpu_custom_call.1} parent=5 // pred_check
        %p212 = pneg %p211
      $region34: #{tpu_custom_call.1} parent=5 // pred_check_branch
        %214 = sbr.rel (%p212) target = $region36
      $region35: #{tpu_custom_call.1} parent=5 // pred_region
        %s215 = ssub.s32 %s10, 2
        // Predicated region
        $region37: #{tpu_custom_call.1} parent=35 // pred_check
          %p216 = pneg %p65
        $region38: #{tpu_custom_call.1} parent=35 // pred_check_branch
          %218 = sbr.rel (%p216) target = $region40
        $region39: #{tpu_custom_call.1} parent=35 // pred_region
          %s219 = smul.u32 2, %s16
          %p220 = scmp.lt.s32.totalorder %s219, 3
          %s221 = scalar_select %p220, %s219, 3
          %s222 = smul.addr %s221, 3
          %s223 = smul.addr %s222, 8
          %s224 = scalar_lea.vmem %s1, %s223
        $region40: #{tpu_custom_call.1} parent=35 // pred_fallthru
          _
      $region36: #{tpu_custom_call.1} parent=5 // pred_fallthru
        _
    $region6: #{tpu_custom_call.1} parent=1 // loop_footer
      %s14 = sadd.s32 1, %s10
    $region7: #{tpu_custom_call.1} parent=1 // loop_footer_branch
      %9 = sbr.rel target = $region3
    $region8: #{tpu_custom_call.1} parent=1 // loop_exit
      _
    %225 = vsyncpa [#allocation3], 1
    %s226 = scalar_lea.sflag [#allocation3], 1
    %227 = vsyncpa %s226, 1

</llo_original>
